<compile_context>
chip_gen: v5e
topology: v5e:2x2
jax: 0.10.0
libtpu: 0.0.40
codegen_flags: <defaults>
</compile_context>

<pallas_src>
import jax
import jax.numpy as jnp
from jax.experimental import pallas as pl
from jax.experimental.pallas import tpu as pltpu


HIDDEN = 100          # as in the PyTorch module
LANE = 128            # TPU lane width / MXU-native column count
SUBLANE = 8           # f32 sublane count
TILE_CAP = 1024       # max batch rows per grid step (sweepable)


def _round_up(x, m):
    return ((x + m - 1) // m) * m


def _cdiv(a, b):
    return -(-a // b)


# --------------------------------------------------------------------------
# Kernel: one batch tile of the 3-layer MLP, params resident across the grid.
# --------------------------------------------------------------------------
def gradient_network_kernel(x_ref, p_ref, out_ref):
    """x_ref: (TB, kp) concat[state, actor] (zero-padded);
    p_ref: (kp + 2*128 + 8, 128) packed params; out_ref: (TB, 128)."""
    kp = x_ref.shape[1]
    o_w2 = kp
    o_w3 = o_w2 + LANE
    o_b = o_w3 + LANE

    w1 = p_ref[0:o_w2, :]                  # (kp, 128)
    w2 = p_ref[o_w2:o_w3, :]               # (128, 128)
    w3 = p_ref[o_w3:o_b, :]                # (128, 128)
    bias = p_ref[o_b:o_b + SUBLANE, :]     # aligned (8, 128) tile load
    b1 = bias[0:1, :]
    b2 = bias[1:2, :]
    b3 = bias[2:3, :]

    y = jnp.tanh(jnp.dot(x_ref[...], w1, preferred_element_type=jnp.float32) + b1)
    y = jnp.tanh(jnp.dot(y, w2, preferred_element_type=jnp.float32) + b2)
    out_ref[...] = (jnp.dot(y, w3, preferred_element_type=jnp.float32)
                    + b3).astype(out_ref.dtype)


# --------------------------------------------------------------------------
# One-time parameter packing (call at init, NOT per forward).
# --------------------------------------------------------------------------
def pack_params(params, state_dim, feature_size):
    """Zero-pad and pack all weights/biases into one (rows, 128) f32 buffer.

    Row layout: [W1 (kp rows)] [W2 (128 rows)] [W3 (128 rows)] [b1,b2,b3 (8 rows)].
    """
    hidden = params["w2"].shape[0]
    cat_dim = state_dim + feature_size
    kp = _round_up(cat_dim, SUBLANE)
    assert hidden <= LANE and feature_size <= LANE, (
        "packed layout assumes hidden <= 128 and feature_size <= 128")

    n_rows = kp + LANE + LANE + SUBLANE
    P = jnp.zeros((n_rows, LANE), jnp.float32)

    w1, b1 = params["w1"], params["b1"]    # (cat_dim, hidden), (1, hidden)
    w2, b2 = params["w2"], params["b2"]    # (hidden, hidden),  (1, hidden)
    w3, b3 = params["w3"], params["b3"]    # (hidden, feature_size), (1, feature_size)

    P = P.at[0:cat_dim, 0:hidden].set(w1)
    off = kp
    P = P.at[off:off + hidden, 0:hidden].set(w2)
    off += LANE
    P = P.at[off:off + hidden, 0:feature_size].set(w3)
    off += LANE
    P = P.at[off + 0, 0:hidden].set(b1[0])
    P = P.at[off + 1, 0:hidden].set(b2[0])
    P = P.at[off + 2, 0:feature_size].set(b3[0])
    return P


# --------------------------------------------------------------------------
# Tiling choice: bounded padding waste, >=2 grid steps on mid-size batches
# (keeps both v7x TensorCores busy), tiles capped for VMEM headroom.
# --------------------------------------------------------------------------
def _choose_tiling(B, cap=TILE_CAP, tile_b=None):
    if tile_b is not None:
        tile_b = _round_up(int(tile_b), SUBLANE)
        return tile_b, _round_up(B, tile_b)
    if B <= 2 * SUBLANE:
        tb = _round_up(B, SUBLANE)
        return tb, tb
    num_tiles = max(2, _cdiv(B, cap))           # >= 2 steps for megacore split
    tb = _round_up(_cdiv(B, num_tiles), SUBLANE)  # padding waste < 8*num_tiles rows
    return tb, tb * num_tiles


# --------------------------------------------------------------------------
# Forward (jit-able).  `packed` comes from pack_params(), built once at init.
# --------------------------------------------------------------------------
def gradient_network_forward(state, actor_params, packed, *, tile_b=None):
    """state: (B, state_dim), actor_params: (B, feature_size) -> (B, feature_size)."""
    B, state_dim = state.shape
    feature_size = actor_params.shape[1]
    cat_dim = state_dim + feature_size
    kp = _round_up(cat_dim, SUBLANE)
    n_rows = packed.shape[0]
    assert n_rows == kp + LANE + LANE + SUBLANE, "packed buffer/shape mismatch"

    tile_b, b_pad = _choose_tiling(B, tile_b=tile_b)
    grid = (b_pad // tile_b,)

    # Single lane-contiguous layer-1 operand; pad only if actually needed.
    x = jnp.concatenate([state.astype(jnp.float32),
                         actor_params.astype(jnp.float32)], axis=1)
    if b_pad != B or kp != cat_dim:
        x = jnp.pad(x, ((0, b_pad - B), (0, kp - cat_dim)))

    out_padded = pl.pallas_call(
        gradient_network_kernel,
        out_shape=jax.ShapeDtypeStruct((b_pad, LANE), jnp.float32),
        grid_spec=pltpu.PrefetchScalarGridSpec(
            num_scalar_prefetch=0,
            grid=grid,
            in_specs=[
                pl.BlockSpec((tile_b, kp), lambda i: (i, 0)),      # input tile
                pl.BlockSpec((n_rows, LANE), lambda i: (0, 0)),    # packed params (resident)
            ],
            out_specs=pl.BlockSpec((tile_b, LANE), lambda i: (i, 0)),
        ),
        compiler_params=pltpu.CompilerParams(
            dimension_semantics=("parallel",),
        ),
    )(x, packed)

    # NOTE: if downstream can consume the (b_pad, 128) padded slab directly,
    # return out_padded instead to skip this HBM slice pass.
    return out_padded[:B, :feature_size]


# --------------------------------------------------------------------------
# Synthetic init + pure-JAX reference
# --------------------------------------------------------------------------
def init_params(key, state_dim, feature_size=64, hidden=HIDDEN):
    """Deterministic synthetic init (PyTorch-style uniform fan-in bounds)."""
    ks = jax.random.split(key, 6)
    in1 = feature_size + state_dim

    def lin(kw, kb, fan_in, fan_out):
        bound = 1.0 / jnp.sqrt(fan_in)
        w = jax.random.uniform(kw, (fan_in, fan_out), jnp.float32, -bound, bound)
        b = jax.random.uniform(kb, (1, fan_out), jnp.float32, -bound, bound)
        return w, b

    w1, b1 = lin(ks[0], ks[1], in1, hidden)
    w2, b2 = lin(ks[2], ks[3], hidden, hidden)
    w3, b3 = lin(ks[4], ks[5], hidden, feature_size)
    return {"w1": w1, "b1": b1, "w2": w2, "b2": b2, "w3": w3, "b3": b3}


def reference_forward(state, actor_params, params):
    x = jnp.concatenate([state, actor_params], axis=1)
    y = jnp.tanh(x @ params["w1"] + params["b1"])
    y = jnp.tanh(y @ params["w2"] + params["b2"])
    return y @ params["w3"] + params["b3"]


if __name__ == "__main__":
    key = jax.random.PRNGKey(0)
    k_state, k_actor, k_params = jax.random.split(key, 3)

    batch = 2
    state_dim = 8
    feature_size = 64

    state = jax.random.normal(k_state, (batch, state_dim), jnp.float32)
    actor_params = jax.random.normal(k_actor, (batch, feature_size), jnp.float32)
    params = init_params(k_params, state_dim, feature_size)

    # Pack ONCE at init; forward only consumes the packed buffer.
    packed = jax.block_until_ready(pack_params(params, state_dim, feature_size))

    fwd = jax.jit(gradient_network_forward)
    out = jax.block_until_ready(fwd(state, actor_params, packed))

    ref = reference_forward(state, actor_params, params)
    assert out.shape == (batch, feature_size)
    assert jnp.allclose(out, ref, atol=1e-5, rtol=1e-5)

    print("KERNEL_OK")
</pallas_src>

<mosaic_0001>
module attributes {stable_mosaic.version = 11 : i64} {
  func.func @gradient_network_kernel(%arg0: i32, %arg1: memref<8x72xf32, #tpu.memory_space<vmem>>, %arg2: memref<336x128xf32, #tpu.memory_space<vmem>>, %arg3: memref<8x128xf32, #tpu.memory_space<vmem>>) attributes {dimension_semantics = [#tpu.dimension_semantics<parallel>], iteration_bounds = array<i64: 1>, scalar_prefetch = 0 : i64, scratch_operands = 0 : i64, tpu.core_type = #tpu.core_type<tc>, window_params = [{transform_indices = @transform_0, window_bounds = array<i64: 8, 72>}, {pipeline_mode = #tpu.pipeline_mode<synchronous>, transform_indices = @transform_1, window_bounds = array<i64: 336, 128>}, {transform_indices = @transform_2, window_bounds = array<i64: 8, 128>}]} {
    %c0 = arith.constant 0 : index
    %c0_0 = arith.constant 0 : index
    %0 = vector.load %arg2[%c0, %c0_0] : memref<336x128xf32, #tpu.memory_space<vmem>>, vector<72x128xf32>
    %c72 = arith.constant 72 : index
    %c0_1 = arith.constant 0 : index
    %1 = vector.load %arg2[%c72, %c0_1] : memref<336x128xf32, #tpu.memory_space<vmem>>, vector<128x128xf32>
    %c200 = arith.constant 200 : index
    %c0_2 = arith.constant 0 : index
    %2 = vector.load %arg2[%c200, %c0_2] : memref<336x128xf32, #tpu.memory_space<vmem>>, vector<128x128xf32>
    %c328 = arith.constant 328 : index
    %c0_3 = arith.constant 0 : index
    %3 = vector.load %arg2[%c328, %c0_3] : memref<336x128xf32, #tpu.memory_space<vmem>>, vector<8x128xf32>
    %4 = vector.extract_strided_slice %3 {offsets = [0, 0], sizes = [1, 128], strides = [1, 1]} : vector<8x128xf32> to vector<1x128xf32>
    %5 = vector.extract_strided_slice %3 {offsets = [1, 0], sizes = [1, 128], strides = [1, 1]} : vector<8x128xf32> to vector<1x128xf32>
    %6 = vector.extract_strided_slice %3 {offsets = [2, 0], sizes = [1, 128], strides = [1, 1]} : vector<8x128xf32> to vector<1x128xf32>
    %c0_4 = arith.constant 0 : index
    %c0_5 = arith.constant 0 : index
    %7 = vector.load %arg1[%c0_4, %c0_5] : memref<8x72xf32, #tpu.memory_space<vmem>>, vector<8x72xf32>
    %cst = arith.constant dense<0.000000e+00> : vector<8x128xf32>
    %8 = tpu.matmul %7, %0, %cst {dimension_numbers = #tpu.dot_dimension_numbers<[1], [0], [0], [1], [0, 0, 1, 1], [], []>} : vector<8x72xf32>, vector<72x128xf32>, vector<8x128xf32> -> vector<8x128xf32>
    %9 = vector.broadcast %4 : vector<1x128xf32> to vector<8x128xf32>
    %10 = arith.addf %8, %9 : vector<8x128xf32>
    %11 = math.tanh %10 : vector<8x128xf32>
    %cst_6 = arith.constant dense<0.000000e+00> : vector<8x128xf32>
    %12 = tpu.matmul %11, %1, %cst_6 {dimension_numbers = #tpu.dot_dimension_numbers<[1], [0], [0], [1], [0, 0, 1, 1], [], []>} : vector<8x128xf32>, vector<128x128xf32>, vector<8x128xf32> -> vector<8x128xf32>
    %13 = vector.broadcast %5 : vector<1x128xf32> to vector<8x128xf32>
    %14 = arith.addf %12, %13 : vector<8x128xf32>
    %15 = math.tanh %14 : vector<8x128xf32>
    %cst_7 = arith.constant dense<0.000000e+00> : vector<8x128xf32>
    %16 = tpu.matmul %15, %2, %cst_7 {dimension_numbers = #tpu.dot_dimension_numbers<[1], [0], [0], [1], [0, 0, 1, 1], [], []>} : vector<8x128xf32>, vector<128x128xf32>, vector<8x128xf32> -> vector<8x128xf32>
    %17 = vector.broadcast %6 : vector<1x128xf32> to vector<8x128xf32>
    %18 = arith.addf %16, %17 : vector<8x128xf32>
    %c0_8 = arith.constant 0 : index
    %c0_9 = arith.constant 0 : index
    %19 = vector.load %arg3[%c0_8, %c0_9] : memref<8x128xf32, #tpu.memory_space<vmem>>, vector<8x128xf32>
    tpu.vector_store %arg3[%c0_8, %c0_9], %18 {strides = array<i32>} : memref<8x128xf32, #tpu.memory_space<vmem>>, vector<8x128xf32>,
    return
  }
  func.func @transform_0(%arg0: i32) -> (i32, i32) {
    %c0_i32 = arith.constant 0 : i32
    %c0_i32_0 = arith.constant 0 : i32
    return %arg0, %c0_i32 : i32, i32
  }
  func.func @transform_1(%arg0: i32) -> (i32, i32) {
    %c0_i32 = arith.constant 0 : i32
    %c0_i32_0 = arith.constant 0 : i32
    %c0_i32_1 = arith.constant 0 : i32
    return %c0_i32, %c0_i32_0 : i32, i32
  }
  func.func @transform_2(%arg0: i32) -> (i32, i32) {
    %c0_i32 = arith.constant 0 : i32
    %c0_i32_0 = arith.constant 0 : i32
    return %arg0, %c0_i32 : i32, i32
  }
}

</mosaic_0001>

<llo_original>
// kernel: gradient_network_forward.1
$region0: #{gradient_network_forward.1}
  #allocation0 [shape = 'u32[]', space=smem, size = 0x4, offset = 0x4, fixed_abs, tag = 'smem constant byte address 0x4 - core index']
  #allocation1 [shape = 'u32[72,128]{1,0:T(1,128)}', space=vmem, size = 0x9000, scoped, tag = 'internal scratch']
  %s0 = inlined_call_operand.vmem [shape: f32[8,72], index: 0, kind: input, shape index: {}]
  %s1 = inlined_call_operand.hbm [shape: f32[336,128], index: 1, kind: input, shape index: {}]
  %s2 = inlined_call_operand.vmem [shape: f32[8,128], index: 2, kind: output, shape index: {}]
  %s3 = sld [smem:[#allocation0]]
  $region22: #{gradient_network_forward.1} parent=0
    _
  %s5 = ssub.s32 1, %s3
  %s6 = scalar_select 0, %s5, %s3
  $region1: #{gradient_network_forward.1} parent=0
    #allocation2 [shape = 'u8[172032]{0}', space=vmem, size = 0x2a000, scoped, tag = 'input window, operand 1, single buffered']
    #allocation3 [shape = 's32[1]{0}', space=sflag, size = 0x4, scoped, tag = 'scoped memory for gradient_network_forward.1']
    %7 = vsyncpa [#allocation3], 0
    // Predicated region
    $region2: #{gradient_network_forward.1} parent=1 // pred_check
      _
    $region3: #{gradient_network_forward.1} parent=1 // pred_check_branch
      %9 = sbr.rel (0) target = $region5
    $region4: #{gradient_network_forward.1} parent=1 // pred_region
      _
    $region5: #{gradient_network_forward.1} parent=1 // pred_fallthru
      _
    // Predicated region
    $region6: #{gradient_network_forward.1} parent=1 // pred_check
      _
    $region7: #{gradient_network_forward.1} parent=1 // pred_check_branch
      %11 = sbr.rel (0) target = $region9
    $region8: #{gradient_network_forward.1} parent=1 // pred_region
      %13 = vsyncadd [#allocation3], 0
      %s14 = sshll.u32 %s1, 4
      %s15 = int_to_ptr.hbm [resolvable:$true] %s14
      %s16 = sshll.u32 [#allocation2], 4
      %s17 = int_to_ptr.vmem [resolvable:$true] %s16
      %22 = dma.hbm_to_vmem [thread:$0]  %s15, 5376, %s17, [#allocation3], 128, 128, 8
    $region9: #{gradient_network_forward.1} parent=1 // pred_fallthru
      _
    // Predicated region
    $region10: #{gradient_network_forward.1} parent=1 // pred_check
      _
    $region11: #{gradient_network_forward.1} parent=1 // pred_check_branch
      %24 = sbr.rel (0) target = $region13
    $region12: #{gradient_network_forward.1} parent=1 // pred_region
      %26 = dma.done [#allocation3], 5376
    $region13: #{gradient_network_forward.1} parent=1 // pred_fallthru
      _
    %v27 = vld [vmem:[#allocation2] sm:$0xff]
    %v28 = vld [vmem:[#allocation2 + $0x8] sm:$0xff]
    %v29 = vld [vmem:[#allocation2 + $0x10] sm:$0xff]
    %v30 = vld [vmem:[#allocation2 + $0x18] sm:$0xff]
    %v31 = vld [vmem:[#allocation2 + $0x20] sm:$0xff]
    %v32 = vld [vmem:[#allocation2 + $0x28] sm:$0xff]
    %v33 = vld [vmem:[#allocation2 + $0x30] sm:$0xff]
    %v34 = vld [vmem:[#allocation2 + $0x38] sm:$0xff]
    %v35 = vld [vmem:[#allocation2 + $0x40] sm:$0xff]
    %v36 = vld [vmem:[#allocation2 + $0x48] sm:$0xff]
    %v37 = vld [vmem:[#allocation2 + $0x50] sm:$0xff]
    %v38 = vld [vmem:[#allocation2 + $0x58] sm:$0xff]
    %v39 = vld [vmem:[#allocation2 + $0x60] sm:$0xff]
    %v40 = vld [vmem:[#allocation2 + $0x68] sm:$0xff]
    %v41 = vld [vmem:[#allocation2 + $0x70] sm:$0xff]
    %v42 = vld [vmem:[#allocation2 + $0x78] sm:$0xff]
    %v43 = vld [vmem:[#allocation2 + $0x80] sm:$0xff]
    %v44 = vld [vmem:[#allocation2 + $0x88] sm:$0xff]
    %v45 = vld [vmem:[#allocation2 + $0x90] sm:$0xff]
    %v46 = vld [vmem:[#allocation2 + $0x98] sm:$0xff]
    %v47 = vld [vmem:[#allocation2 + $0xa0] sm:$0xff]
    %v48 = vld [vmem:[#allocation2 + $0xa8] sm:$0xff]
    %v49 = vld [vmem:[#allocation2 + $0xb0] sm:$0xff]
    %v50 = vld [vmem:[#allocation2 + $0xb8] sm:$0xff]
    %v51 = vld [vmem:[#allocation2 + $0xc0] sm:$0xff]
    %v52 = vld [vmem:[#allocation2 + $0xc8] sm:$0xff]
    %v53 = vld [vmem:[#allocation2 + $0xd0] sm:$0xff]
    %v54 = vld [vmem:[#allocation2 + $0xd8] sm:$0xff]
    %v55 = vld [vmem:[#allocation2 + $0xe0] sm:$0xff]
    %v56 = vld [vmem:[#allocation2 + $0xe8] sm:$0xff]
    %v57 = vld [vmem:[#allocation2 + $0xf0] sm:$0xff]
    %v58 = vld [vmem:[#allocation2 + $0xf8] sm:$0xff]
    %v59 = vld [vmem:[#allocation2 + $0x100] sm:$0xff]
    %v60 = vld [vmem:[#allocation2 + $0x108] sm:$0xff]
    %v61 = vld [vmem:[#allocation2 + $0x110] sm:$0xff]
    %v62 = vld [vmem:[#allocation2 + $0x118] sm:$0xff]
    %v63 = vld [vmem:[#allocation2 + $0x120] sm:$0xff]
    %v64 = vld [vmem:[#allocation2 + $0x128] sm:$0xff]
    %v65 = vld [vmem:[#allocation2 + $0x130] sm:$0xff]
    %v66 = vld [vmem:[#allocation2 + $0x138] sm:$0xff]
    %v67 = vld [vmem:[#allocation2 + $0x140] sm:$0xff]
    %v68 = vld [vmem:[#allocation2 + $0x148] sm:$0xff]
    %v69 = vld [vmem:[%s0] sm:$0xff]
    %v70 = vperm.slane %v68, 0
    %vm71 = vcmask 588800
    %v73 = vsel %vm71, %v69, 0
    %75 = vmatpush.msra.mxu0 0.0
    %76 = vmatpush.msra.mxu0 0.0
    %77 = vmatpush.msra.mxu0 0.0
    %78 = vmatpush.msra.mxu0 0.0
    %79 = vmatpush.msra.mxu0 0.0
    %80 = vmatpush.msra.mxu0 0.0
    %81 = vmatpush.msra.mxu0 0.0
    %82 = vmatpush.msra.mxu0 %v35
    %83 = vmatpush.msra.mxu0 %v34
    %84 = vmatpush.msra.mxu0 %v33
    %85 = vmatpush.msra.mxu0 %v32
    %86 = vmatpush.msra.mxu0 %v31
    %87 = vmatpush.msra.mxu0 %v30
    %88 = vmatpush.msra.mxu0 %v29
    %89 = vmatpush.msra.mxu0 %v28
    %90 = vmatpush.msra.mxu0 %v27
    %91 = vmatmul.f32.gmra.mxu0 %v73
    %v92 = vpop.f32.mrf.mxu0
    %v93 = vadd.f32 %v70, %v92
    %94 = vdwg.mxu0
    %v95 = vtanh.pop %v93
    %v96 = vperm.slane %v68, 1
    %97 = vmatpush.msra.mxu0 %v51
    %98 = vmatpush.msra.mxu0 %v50
    %99 = vmatpush.msra.mxu0 %v49
    %100 = vmatpush.msra.mxu0 %v48
    %101 = vmatpush.msra.mxu0 %v47
    %102 = vmatpush.msra.mxu0 %v46
    %103 = vmatpush.msra.mxu0 %v45
    %104 = vmatpush.msra.mxu0 %v44
    %105 = vmatpush.msra.mxu0 %v43
    %106 = vmatpush.msra.mxu0 %v42
    %107 = vmatpush.msra.mxu0 %v41
    %108 = vmatpush.msra.mxu0 %v40
    %109 = vmatpush.msra.mxu0 %v39
    %110 = vmatpush.msra.mxu0 %v38
    %111 = vmatpush.msra.mxu0 %v37
    %112 = vmatpush.msra.mxu0 %v36
    %113 = vmatmul.f32.gmra.mxu0 %v95
    %v114 = vpop.f32.mrf.mxu0
    %v115 = vadd.f32 %v96, %v114
    %116 = vdwg.mxu0
    %v117 = vtanh.pop %v115
    %v118 = vperm.slane %v68, 2
    %119 = vmatpush.msra.mxu0 %v67
    %120 = vmatpush.msra.mxu0 %v66
    %121 = vmatpush.msra.mxu0 %v65
    %122 = vmatpush.msra.mxu0 %v64
    %123 = vmatpush.msra.mxu0 %v63
    %124 = vmatpush.msra.mxu0 %v62
    %125 = vmatpush.msra.mxu0 %v61
    %126 = vmatpush.msra.mxu0 %v60
    %127 = vmatpush.msra.mxu0 %v59
    %128 = vmatpush.msra.mxu0 %v58
    %129 = vmatpush.msra.mxu0 %v57
    %130 = vmatpush.msra.mxu0 %v56
    %131 = vmatpush.msra.mxu0 %v55
    %132 = vmatpush.msra.mxu0 %v54
    %133 = vmatpush.msra.mxu0 %v53
    %134 = vmatpush.msra.mxu0 %v52
    %135 = vmatmul.f32.gmra.mxu0 %v117
    %v136 = vpop.f32.mrf.mxu0
    %v137 = vadd.f32 %v118, %v136
    %138 = vdwg.mxu0
    %139 = vst [vmem:[%s2] sm:$0xff] %v137
    // Predicated region
    $region14: #{gradient_network_forward.1} parent=1 // pred_check
      _
    $region15: #{gradient_network_forward.1} parent=1 // pred_check_branch
      %141 = sbr.rel (0) target = $region17
    $region16: #{gradient_network_forward.1} parent=1 // pred_region
      _
    $region17: #{gradient_network_forward.1} parent=1 // pred_fallthru
      _
    // Predicated region
    $region18: #{gradient_network_forward.1} parent=1 // pred_check
      _
    $region19: #{gradient_network_forward.1} parent=1 // pred_check_branch
      %143 = sbr.rel (0) target = $region21
    $region20: #{gradient_network_forward.1} parent=1 // pred_region
      _
    $region21: #{gradient_network_forward.1} parent=1 // pred_fallthru
      _
    %144 = vsyncpa [#allocation3], 1

</llo_original>
